<compile_context>
chip_gen: v7x
topology: tpu7x:2x2x1
jax: 0.10.0
libtpu: 0.0.40
codegen_flags: <defaults>
</compile_context>

<pallas_src>
import jax
import jax.numpy as jnp
from jax import lax
from jax.experimental import pallas as pl
from jax.experimental.pallas import tpu as pltpu


def _pick_chunk_rows(tr):
    """Largest chunk of sublane-rows (multiple of 8) that divides TR."""
    for ch in (32, 16, 8):
        if tr % ch == 0:
            return ch
    return tr  # tiny blocks (TR < 8, full-extent dim) processed in one chunk


def _head_kernel(x1_ref, x2_ref, w1_ref, b1_ref, w2_ref, b2_ref, o_ref):
    # x1_ref: (1, C1, TR, 128) VMEM   x2_ref: (1, C2, TR, 128) VMEM
    # w1_ref: (O1, C1) SMEM           b1_ref: (O1,) SMEM
    # w2_ref: (O2, C2) SMEM           b2_ref: (O2,) SMEM
    # o_ref : (1, O1+O2, TR, 128) VMEM
    C1 = x1_ref.shape[1]
    C2 = x2_ref.shape[1]
    O1 = w1_ref.shape[0]
    O2 = w2_ref.shape[0]
    TR = x1_ref.shape[2]
    CH = _pick_chunk_rows(TR)
    n_chunks = TR // CH

    def process_chunk(i):
        r0 = pl.multiple_of(i * CH, CH)
        rows = pl.ds(r0, CH)

        def conv(x_ref, w_ref, b_ref, n_in, n_out, o_base):
            # Channel-outer / output-inner: each input channel chunk is loaded
            # exactly once; accumulators start from the broadcast bias.
            acc = [jnp.full((CH, 128), b_ref[o], jnp.float32) for o in range(n_out)]
            for c in range(n_in):
                xc = x_ref[0, c, rows, :].astype(jnp.float32)
                for o in range(n_out):
                    acc[o] = acc[o] + xc * w_ref[o, c]
            for o in range(n_out):
                o_ref[0, o_base + o, rows, :] = acc[o].astype(o_ref.dtype)

        conv(x1_ref, w1_ref, b1_ref, C1, O1, 0)
        conv(x2_ref, w2_ref, b2_ref, C2, O2, O1)

    if n_chunks == 1:
        process_chunk(0)
    else:
        def body(i, carry):
            process_chunk(i)
            return carry

        # Short fixed trip counts: unroll for LLO scheduler visibility.
        lax.fori_loop(0, n_chunks, body, 0, unroll=(n_chunks <= 16))


def model_head_forward(x1, x2, w1, b1, w2, b2, *, target_step_bytes=2 * 1024 * 1024):
    """Fused Model_Head.forward.

    x1: (N, C1, D, H, W), x2: (N, C2, D, H, W)
    w1: (O1, C1), b1: (O1,), w2: (O2, C2), b2: (O2,)
    returns (N, O1+O2, D, H, W)  ==  cat([conv1(x1), conv2(x2)], dim=1)
    """
    N, C1, D, H, W = x1.shape
    N2, C2, D2, H2, W2 = x2.shape
    assert (N, D, H, W) == (N2, D2, H2, W2), "input1/input2 must share N, D, H, W"
    assert x1.dtype == x2.dtype, "input1/input2 must share dtype"
    O1, O2 = w1.shape[0], w2.shape[0]
    O = O1 + O2
    S = D * H * W

    # Lane-dense 2-D spatial view: S -> (R, 128). Padding only triggers in the
    # uncommon case S % 128 != 0 (it costs an extra HBM pass, so avoided
    # whenever possible). Ragged row tiles are handled by Pallas partial-block
    # masking on writeback, not by padding.
    S_pad = ((S + 127) // 128) * 128
    x1f = x1.reshape(N, C1, S)
    x2f = x2.reshape(N, C2, S)
    if S_pad != S:
        pad = ((0, 0), (0, 0), (0, S_pad - S))
        x1f = jnp.pad(x1f, pad)
        x2f = jnp.pad(x2f, pad)
    R = S_pad // 128
    x1v = x1f.reshape(N, C1, R, 128)
    x2v = x2f.reshape(N, C2, R, 128)

    # Tile selection: ~target_step_bytes of HBM traffic per grid step.
    itemsize = jnp.dtype(x1.dtype).itemsize
    rows_io = C1 + C2 + O
    tr = max(8, int(target_step_bytes) // (rows_io * 128 * itemsize))
    tr = (tr // 8) * 8
    TR = min(tr, R)
    if TR < R:
        TR = max(8, (TR // 8) * 8)
    # Keep >= ~8 grid steps when possible so megacore (v7x) has work to shard.
    while N * pl.cdiv(R, TR) < 8 and TR > 8:
        new_tr = max(8, ((TR // 2) // 8) * 8)
        if new_tr == TR:
            break
        TR = new_tr
    r_tiles = pl.cdiv(R, TR)

    flops = 2 * N * S * (O1 * C1 + O2 * C2)
    bytes_accessed = N * S * (C1 + C2 + O) * itemsize
    cost = pl.CostEstimate(flops=flops, transcendentals=0,
                           bytes_accessed=bytes_accessed)

    out = pl.pallas_call(
        _head_kernel,
        out_shape=jax.ShapeDtypeStruct((N, O, R, 128), x1.dtype),
        grid=(N, r_tiles),
        in_specs=[
            pl.BlockSpec((1, C1, TR, 128), lambda n, r: (n, 0, r, 0)),
            pl.BlockSpec((1, C2, TR, 128), lambda n, r: (n, 0, r, 0)),
            pl.BlockSpec(memory_space=pltpu.MemorySpace.SMEM),  # w1
            pl.BlockSpec(memory_space=pltpu.MemorySpace.SMEM),  # b1
            pl.BlockSpec(memory_space=pltpu.MemorySpace.SMEM),  # w2
            pl.BlockSpec(memory_space=pltpu.MemorySpace.SMEM),  # b2
        ],
        out_specs=pl.BlockSpec((1, O, TR, 128), lambda n, r: (n, 0, r, 0)),
        compiler_params=pltpu.CompilerParams(
            dimension_semantics=("parallel", "parallel")),
        cost_estimate=cost,
    )(x1v, x2v, w1, b1, w2, b2)

    out = out.reshape(N, O, S_pad)
    if S_pad != S:
        out = out[:, :, :S]
    return out.reshape(N, O, D, H, W)


class ModelHeadPallas:
    """JAX/Pallas equivalent of Model_Head.forward."""

    def __init__(self, in_channel1, in_channel2, head1, head2, label_smooth,
                 key=None, dtype=jnp.float32):
        self.label_smooth = label_smooth  # used only by loss(), kept for parity
        if key is None:
            key = jax.random.PRNGKey(0)
        k1, k2, k3, k4 = jax.random.split(key, 4)
        # Conv3d with kernel_size=1 -> weight (O, C), bias (O,)
        self.w1 = jax.random.normal(k1, (head1, in_channel1), dtype) * 0.1
        self.b1 = jax.random.normal(k2, (head1,), dtype) * 0.1
        self.w2 = jax.random.normal(k3, (head2, in_channel2), dtype) * 0.1
        self.b2 = jax.random.normal(k4, (head2,), dtype) * 0.1

    def __call__(self, inputs):
        input1, input2 = inputs
        return model_head_forward(input1, input2, self.w1, self.b1, self.w2, self.b2)

    # TODO(synk): loss() (DiceLoss / Sensitivity_SpecificityLoss) is not part of
    # forward(); not implemented as a Pallas kernel here.


if __name__ == "__main__":
    key = jax.random.PRNGKey(0)
    kx1, kx2, kp = jax.random.split(key, 3)

    # Small shapes consistent with the module: two NCDHW volumes.
    N, C1, C2 = 2, 4, 4
    D = H = W = 8
    head1, head2 = 2, 1

    x1 = jax.random.normal(kx1, (N, C1, D, H, W), jnp.float32)
    x2 = jax.random.normal(kx2, (N, C2, D, H, W), jnp.float32)

    model = ModelHeadPallas(C1, C2, head1, head2, label_smooth=0.01, key=kp)
    out = model((x1, x2))
    out = jax.block_until_ready(out)

    # Sanity check against a plain-JAX reference of the same math.
    ref1 = jnp.einsum("ncdhw,oc->nodhw", x1, model.w1) + model.b1[None, :, None, None, None]
    ref2 = jnp.einsum("ncdhw,oc->nodhw", x2, model.w2) + model.b2[None, :, None, None, None]
    ref = jnp.concatenate([ref1, ref2], axis=1)
    assert out.shape == (N, head1 + head2, D, H, W)
    assert jnp.allclose(out, ref, atol=1e-5, rtol=1e-5)

    print("KERNEL_OK")
</pallas_src>

<mosaic_0001>
module attributes {stable_mosaic.version = 11 : i64} {
  func.func @_head_kernel(%arg0: i32, %arg1: i32, %arg2: memref<1x4x4x128xf32, #tpu.memory_space<vmem>>, %arg3: memref<1x4x4x128xf32, #tpu.memory_space<vmem>>, %arg4: memref<2x4xf32, #tpu.memory_space<smem>>, %arg5: memref<2xf32, #tpu.memory_space<smem>>, %arg6: memref<1x4xf32, #tpu.memory_space<smem>>, %arg7: memref<1xf32, #tpu.memory_space<smem>>, %arg8: memref<1x3x4x128xf32, #tpu.memory_space<vmem>>) attributes {dimension_semantics = [#tpu.dimension_semantics<parallel>, #tpu.dimension_semantics<parallel>], iteration_bounds = array<i64: 2, 1>, scalar_prefetch = 0 : i64, scratch_operands = 0 : i64, tpu.core_type = #tpu.core_type<tc>, window_params = [{transform_indices = @transform_0, window_bounds = array<i64: 1, 4, 4, 128>}, {transform_indices = @transform_1, window_bounds = array<i64: 1, 4, 4, 128>}, {transform_indices = @transform_2, window_bounds = array<i64: 2, 4>}, {transform_indices = @transform_3, window_bounds = array<i64: 2>}, {transform_indices = @transform_4, window_bounds = array<i64: 1, 4>}, {transform_indices = @transform_5, window_bounds = array<i64: 1>}, {transform_indices = @transform_6, window_bounds = array<i64: 1, 3, 4, 128>}]} {
    %c0_i32 = arith.constant 0 : i32
    %0 = tpu.assume_multiple %c0_i32, 4 : i32
    %c0 = arith.constant 0 : index
    %1 = memref.load %arg5[%c0] : memref<2xf32, #tpu.memory_space<smem>>
    %2 = vector.broadcast %1 : f32 to vector<4x128xf32>
    %c1 = arith.constant 1 : index
    %3 = memref.load %arg5[%c1] : memref<2xf32, #tpu.memory_space<smem>>
    %4 = vector.broadcast %3 : f32 to vector<4x128xf32>
    %c0_0 = arith.constant 0 : index
    %c0_1 = arith.constant 0 : index
    %5 = arith.index_cast %0 : i32 to index
    %c0_2 = arith.constant 0 : index
    %6 = vector.load %arg2[%c0_0, %c0_1, %5, %c0_2] : memref<1x4x4x128xf32, #tpu.memory_space<vmem>>, vector<1x1x4x128xf32>
    %7 = vector.shape_cast %6 : vector<1x1x4x128xf32> to vector<4x128xf32>
    %c0_3 = arith.constant 0 : index
    %c0_4 = arith.constant 0 : index
    %8 = memref.load %arg4[%c0_3, %c0_4] : memref<2x4xf32, #tpu.memory_space<smem>>
    %9 = vector.broadcast %8 : f32 to vector<4x128xf32>
    %10 = arith.mulf %7, %9 : vector<4x128xf32>
    %11 = arith.addf %2, %10 : vector<4x128xf32>
    %c1_5 = arith.constant 1 : index
    %c0_6 = arith.constant 0 : index
    %12 = memref.load %arg4[%c1_5, %c0_6] : memref<2x4xf32, #tpu.memory_space<smem>>
    %13 = vector.broadcast %12 : f32 to vector<4x128xf32>
    %14 = arith.mulf %7, %13 : vector<4x128xf32>
    %15 = arith.addf %4, %14 : vector<4x128xf32>
    %c0_7 = arith.constant 0 : index
    %c1_8 = arith.constant 1 : index
    %16 = arith.index_cast %0 : i32 to index
    %c0_9 = arith.constant 0 : index
    %17 = vector.load %arg2[%c0_7, %c1_8, %16, %c0_9] : memref<1x4x4x128xf32, #tpu.memory_space<vmem>>, vector<1x1x4x128xf32>
    %18 = vector.shape_cast %17 : vector<1x1x4x128xf32> to vector<4x128xf32>
    %c0_10 = arith.constant 0 : index
    %c1_11 = arith.constant 1 : index
    %19 = memref.load %arg4[%c0_10, %c1_11] : memref<2x4xf32, #tpu.memory_space<smem>>
    %20 = vector.broadcast %19 : f32 to vector<4x128xf32>
    %21 = arith.mulf %18, %20 : vector<4x128xf32>
    %22 = arith.addf %11, %21 : vector<4x128xf32>
    %c1_12 = arith.constant 1 : index
    %c1_13 = arith.constant 1 : index
    %23 = memref.load %arg4[%c1_12, %c1_13] : memref<2x4xf32, #tpu.memory_space<smem>>
    %24 = vector.broadcast %23 : f32 to vector<4x128xf32>
    %25 = arith.mulf %18, %24 : vector<4x128xf32>
    %26 = arith.addf %15, %25 : vector<4x128xf32>
    %c0_14 = arith.constant 0 : index
    %c2 = arith.constant 2 : index
    %27 = arith.index_cast %0 : i32 to index
    %c0_15 = arith.constant 0 : index
    %28 = vector.load %arg2[%c0_14, %c2, %27, %c0_15] : memref<1x4x4x128xf32, #tpu.memory_space<vmem>>, vector<1x1x4x128xf32>
    %29 = vector.shape_cast %28 : vector<1x1x4x128xf32> to vector<4x128xf32>
    %c0_16 = arith.constant 0 : index
    %c2_17 = arith.constant 2 : index
    %30 = memref.load %arg4[%c0_16, %c2_17] : memref<2x4xf32, #tpu.memory_space<smem>>
    %31 = vector.broadcast %30 : f32 to vector<4x128xf32>
    %32 = arith.mulf %29, %31 : vector<4x128xf32>
    %33 = arith.addf %22, %32 : vector<4x128xf32>
    %c1_18 = arith.constant 1 : index
    %c2_19 = arith.constant 2 : index
    %34 = memref.load %arg4[%c1_18, %c2_19] : memref<2x4xf32, #tpu.memory_space<smem>>
    %35 = vector.broadcast %34 : f32 to vector<4x128xf32>
    %36 = arith.mulf %29, %35 : vector<4x128xf32>
    %37 = arith.addf %26, %36 : vector<4x128xf32>
    %c0_20 = arith.constant 0 : index
    %c3 = arith.constant 3 : index
    %38 = arith.index_cast %0 : i32 to index
    %c0_21 = arith.constant 0 : index
    %39 = vector.load %arg2[%c0_20, %c3, %38, %c0_21] : memref<1x4x4x128xf32, #tpu.memory_space<vmem>>, vector<1x1x4x128xf32>
    %40 = vector.shape_cast %39 : vector<1x1x4x128xf32> to vector<4x128xf32>
    %c0_22 = arith.constant 0 : index
    %c3_23 = arith.constant 3 : index
    %41 = memref.load %arg4[%c0_22, %c3_23] : memref<2x4xf32, #tpu.memory_space<smem>>
    %42 = vector.broadcast %41 : f32 to vector<4x128xf32>
    %43 = arith.mulf %40, %42 : vector<4x128xf32>
    %44 = arith.addf %33, %43 : vector<4x128xf32>
    %c1_24 = arith.constant 1 : index
    %c3_25 = arith.constant 3 : index
    %45 = memref.load %arg4[%c1_24, %c3_25] : memref<2x4xf32, #tpu.memory_space<smem>>
    %46 = vector.broadcast %45 : f32 to vector<4x128xf32>
    %47 = arith.mulf %40, %46 : vector<4x128xf32>
    %48 = arith.addf %37, %47 : vector<4x128xf32>
    %c0_26 = arith.constant 0 : index
    %c0_27 = arith.constant 0 : index
    %49 = arith.index_cast %0 : i32 to index
    %c0_28 = arith.constant 0 : index
    %50 = vector.load %arg8[%c0_26, %c0_27, %49, %c0_28] : memref<1x3x4x128xf32, #tpu.memory_space<vmem>>, vector<1x1x4x128xf32>
    %51 = vector.shape_cast %50 : vector<1x1x4x128xf32> to vector<4x128xf32>
    %52 = vector.shape_cast %44 : vector<4x128xf32> to vector<1x1x4x128xf32>
    tpu.vector_store %arg8[%c0_26, %c0_27, %49, %c0_28], %52 {strides = array<i32>} : memref<1x3x4x128xf32, #tpu.memory_space<vmem>>, vector<1x1x4x128xf32>,
    %c0_29 = arith.constant 0 : index
    %c1_30 = arith.constant 1 : index
    %53 = arith.index_cast %0 : i32 to index
    %c0_31 = arith.constant 0 : index
    %54 = vector.load %arg8[%c0_29, %c1_30, %53, %c0_31] : memref<1x3x4x128xf32, #tpu.memory_space<vmem>>, vector<1x1x4x128xf32>
    %55 = vector.shape_cast %54 : vector<1x1x4x128xf32> to vector<4x128xf32>
    %56 = vector.shape_cast %48 : vector<4x128xf32> to vector<1x1x4x128xf32>
    tpu.vector_store %arg8[%c0_29, %c1_30, %53, %c0_31], %56 {strides = array<i32>} : memref<1x3x4x128xf32, #tpu.memory_space<vmem>>, vector<1x1x4x128xf32>,
    %c0_32 = arith.constant 0 : index
    %57 = memref.load %arg7[%c0_32] : memref<1xf32, #tpu.memory_space<smem>>
    %58 = vector.broadcast %57 : f32 to vector<4x128xf32>
    %c0_33 = arith.constant 0 : index
    %c0_34 = arith.constant 0 : index
    %59 = arith.index_cast %0 : i32 to index
    %c0_35 = arith.constant 0 : index
    %60 = vector.load %arg3[%c0_33, %c0_34, %59, %c0_35] : memref<1x4x4x128xf32, #tpu.memory_space<vmem>>, vector<1x1x4x128xf32>
    %61 = vector.shape_cast %60 : vector<1x1x4x128xf32> to vector<4x128xf32>
    %c0_36 = arith.constant 0 : index
    %c0_37 = arith.constant 0 : index
    %62 = memref.load %arg6[%c0_36, %c0_37] : memref<1x4xf32, #tpu.memory_space<smem>>
    %63 = vector.broadcast %62 : f32 to vector<4x128xf32>
    %64 = arith.mulf %61, %63 : vector<4x128xf32>
    %65 = arith.addf %58, %64 : vector<4x128xf32>
    %c0_38 = arith.constant 0 : index
    %c1_39 = arith.constant 1 : index
    %66 = arith.index_cast %0 : i32 to index
    %c0_40 = arith.constant 0 : index
    %67 = vector.load %arg3[%c0_38, %c1_39, %66, %c0_40] : memref<1x4x4x128xf32, #tpu.memory_space<vmem>>, vector<1x1x4x128xf32>
    %68 = vector.shape_cast %67 : vector<1x1x4x128xf32> to vector<4x128xf32>
    %c0_41 = arith.constant 0 : index
    %c1_42 = arith.constant 1 : index
    %69 = memref.load %arg6[%c0_41, %c1_42] : memref<1x4xf32, #tpu.memory_space<smem>>
    %70 = vector.broadcast %69 : f32 to vector<4x128xf32>
    %71 = arith.mulf %68, %70 : vector<4x128xf32>
    %72 = arith.addf %65, %71 : vector<4x128xf32>
    %c0_43 = arith.constant 0 : index
    %c2_44 = arith.constant 2 : index
    %73 = arith.index_cast %0 : i32 to index
    %c0_45 = arith.constant 0 : index
    %74 = vector.load %arg3[%c0_43, %c2_44, %73, %c0_45] : memref<1x4x4x128xf32, #tpu.memory_space<vmem>>, vector<1x1x4x128xf32>
    %75 = vector.shape_cast %74 : vector<1x1x4x128xf32> to vector<4x128xf32>
    %c0_46 = arith.constant 0 : index
    %c2_47 = arith.constant 2 : index
    %76 = memref.load %arg6[%c0_46, %c2_47] : memref<1x4xf32, #tpu.memory_space<smem>>
    %77 = vector.broadcast %76 : f32 to vector<4x128xf32>
    %78 = arith.mulf %75, %77 : vector<4x128xf32>
    %79 = arith.addf %72, %78 : vector<4x128xf32>
    %c0_48 = arith.constant 0 : index
    %c3_49 = arith.constant 3 : index
    %80 = arith.index_cast %0 : i32 to index
    %c0_50 = arith.constant 0 : index
    %81 = vector.load %arg3[%c0_48, %c3_49, %80, %c0_50] : memref<1x4x4x128xf32, #tpu.memory_space<vmem>>, vector<1x1x4x128xf32>
    %82 = vector.shape_cast %81 : vector<1x1x4x128xf32> to vector<4x128xf32>
    %c0_51 = arith.constant 0 : index
    %c3_52 = arith.constant 3 : index
    %83 = memref.load %arg6[%c0_51, %c3_52] : memref<1x4xf32, #tpu.memory_space<smem>>
    %84 = vector.broadcast %83 : f32 to vector<4x128xf32>
    %85 = arith.mulf %82, %84 : vector<4x128xf32>
    %86 = arith.addf %79, %85 : vector<4x128xf32>
    %c0_53 = arith.constant 0 : index
    %c2_54 = arith.constant 2 : index
    %87 = arith.index_cast %0 : i32 to index
    %c0_55 = arith.constant 0 : index
    %88 = vector.load %arg8[%c0_53, %c2_54, %87, %c0_55] : memref<1x3x4x128xf32, #tpu.memory_space<vmem>>, vector<1x1x4x128xf32>
    %89 = vector.shape_cast %88 : vector<1x1x4x128xf32> to vector<4x128xf32>
    %90 = vector.shape_cast %86 : vector<4x128xf32> to vector<1x1x4x128xf32>
    tpu.vector_store %arg8[%c0_53, %c2_54, %87, %c0_55], %90 {strides = array<i32>} : memref<1x3x4x128xf32, #tpu.memory_space<vmem>>, vector<1x1x4x128xf32>,
    return
  }
  func.func @transform_0(%arg0: i32, %arg1: i32) -> (i32, i32, i32, i32) {
    %c0_i32 = arith.constant 0 : i32
    %c0_i32_0 = arith.constant 0 : i32
    %c0_i32_1 = arith.constant 0 : i32
    return %arg0, %c0_i32, %arg1, %c0_i32_0 : i32, i32, i32, i32
  }
  func.func @transform_1(%arg0: i32, %arg1: i32) -> (i32, i32, i32, i32) {
    %c0_i32 = arith.constant 0 : i32
    %c0_i32_0 = arith.constant 0 : i32
    %c0_i32_1 = arith.constant 0 : i32
    return %arg0, %c0_i32, %arg1, %c0_i32_0 : i32, i32, i32, i32
  }
  func.func @transform_2(%arg0: i32, %arg1: i32) -> (i32, i32) {
    %c0_i32 = arith.constant 0 : i32
    %c0_i32_0 = arith.constant 0 : i32
    %c0_i32_1 = arith.constant 0 : i32
    return %c0_i32, %c0_i32_0 : i32, i32
  }
  func.func @transform_3(%arg0: i32, %arg1: i32) -> i32 {
    %c0_i32 = arith.constant 0 : i32
    %c0_i32_0 = arith.constant 0 : i32
    return %c0_i32 : i32
  }
  func.func @transform_4(%arg0: i32, %arg1: i32) -> (i32, i32) {
    %c0_i32 = arith.constant 0 : i32
    %c0_i32_0 = arith.constant 0 : i32
    %c0_i32_1 = arith.constant 0 : i32
    return %c0_i32, %c0_i32_0 : i32, i32
  }
  func.func @transform_5(%arg0: i32, %arg1: i32) -> i32 {
    %c0_i32 = arith.constant 0 : i32
    %c0_i32_0 = arith.constant 0 : i32
    return %c0_i32 : i32
  }
  func.func @transform_6(%arg0: i32, %arg1: i32) -> (i32, i32, i32, i32) {
    %c0_i32 = arith.constant 0 : i32
    %c0_i32_0 = arith.constant 0 : i32
    %c0_i32_1 = arith.constant 0 : i32
    return %arg0, %c0_i32, %arg1, %c0_i32_0 : i32, i32, i32, i32
  }
}

</mosaic_0001>

<llo_original>
// kernel: tpu_custom_call.1
$region0: #{tpu_custom_call.1}
  #allocation0 [shape = 'u32[]', space=smem, size = 0x4, offset = 0x4, fixed_abs, tag = 'smem constant byte address 0x4 - core index']
  #allocation1 [shape = 'u32[144,128]{1,0:T(1,128)}', space=vmem, size = 0x12000, scoped, tag = 'internal scratch']
  #allocation2 [shape = 'f32[1]{0:T(128)S(6)}', space=smem, size = 0x200, scoped, tag = 'scoped memory for tpu_custom_call.1']
  %s0 = inlined_call_operand.hbm [shape: f32[2,4,4,128], index: 0, kind: input, shape index: {}]
  %s1 = inlined_call_operand.hbm [shape: f32[2,4,4,128], index: 1, kind: input, shape index: {}]
  %s2 = inlined_call_operand.vmem [shape: f32[2,4], index: 2, kind: input, shape index: {}]
  %s3 = inlined_call_operand.vmem [shape: f32[2], index: 3, kind: input, shape index: {}]
  %s4 = inlined_call_operand.vmem [shape: f32[1,4], index: 4, kind: input, shape index: {}]
  %s5 = inlined_call_operand.<no memory space> [shape: f32[1], index: 5, kind: input, shape index: {}]
  %s6 = inlined_call_operand.hbm [shape: f32[2,3,4,128], index: 6, kind: output, shape index: {}]
  %s7 = sld [smem:[#allocation0]]
  $region77: #{tpu_custom_call.1} parent=0
    _
  %s9 = ssub.s32 1, %s7
  %s10 = scalar_select 0, %s9, %s7
  %11 = sst [smem:[#allocation2]] %s5
  $region1: #{tpu_custom_call.1} parent=0
    #allocation3 [shape = 'u8[16384]{0}', space=vmem, size = 0x4000, scoped, tag = 'input window, operand 0']
    #allocation4 [shape = 's32[2]{0}', space=sflag, size = 0x8, scoped, tag = 'scoped memory for tpu_custom_call.1']
    #allocation5 [shape = 's32[2]{0}', space=sflag, size = 0x8, scoped, tag = 'scoped memory for tpu_custom_call.1']
    #allocation6 [shape = 's32[2]{0}', space=sflag, size = 0x8, scoped, tag = 'scoped memory for tpu_custom_call.1']
    #allocation7 [shape = 'u8[16384]{0}', space=vmem, size = 0x4000, scoped, tag = 'input window, operand 1']
    #allocation8 [shape = 's32[2]{0}', space=sflag, size = 0x8, scoped, tag = 'scoped memory for tpu_custom_call.1']
    #allocation9 [shape = 'u8[1024]{0}', space=smem, size = 0x400, scoped, tag = 'input window, operand 2, single buffered']
    #allocation10 [shape = 'u8[512]{0}', space=smem, size = 0x200, scoped, tag = 'input window, operand 3, single buffered']
    #allocation11 [shape = 's32[1]{0}', space=sflag, size = 0x4, scoped, tag = 'scoped memory for tpu_custom_call.1']
    #allocation12 [shape = 'u8[512]{0}', space=smem, size = 0x200, scoped, tag = 'input window, operand 4, single buffered']
    #allocation13 [shape = 'u8[12288]{0}', space=vmem, size = 0x3000, scoped, tag = 'output window, operand 0']
    %12 = vsyncpa [#allocation4], 0
    %s13 = scalar_lea.sflag [#allocation4], 1
    %14 = vsyncpa %s13, 0
    %15 = vsyncpa [#allocation8], 0
    %s16 = scalar_lea.sflag [#allocation8], 1
    %17 = vsyncpa %s16, 0
    %18 = vsyncpa [#allocation6], 0
    %19 = vsyncpa [#allocation11], 0
    %20 = vsyncpa [#allocation5], 0
    %s21 = scalar_lea.sflag [#allocation5], 1
    %22 = vsyncpa %s21, 0
    loop: start=0, step=1, limit=4
    $region2: #{tpu_custom_call.1} parent=1 // loop_pre_header
      _
    $region3: #{tpu_custom_call.1} parent=1 // loop_header
      %s24 = sphi 0, %s28
      %p25 = scmp.ge.s32.totalorder %s24, 4
      %s31 = sphi 0, %s43
      %s32 = sphi 0, %s39
      %s33 = sphi 0, %s31
      %s34 = sphi 0, %s32
      %s35 = sphi 0, %s33
      %s36 = sphi 0, %s34
      %s48 = sphi 0, %s50
      %s51 = sphi 0, %s48
      %s52 = sphi 0, %s51
      %s68 = sphi 0, %s52
      %s76 = sphi 0, %s78
      %s79 = sphi 0, %s76
      %s80 = sphi 0, %s79
      %s96 = sphi 0, %s80
      %s100 = sphi 0, %s100
      %s102 = sphi 0, %s100
      %s103 = sphi 0, %s102
      %s117 = sphi 0, %s103
      %s121 = sphi 0, %s121
      %s123 = sphi 0, %s121
      %s124 = sphi 0, %s123
      %s138 = sphi 0, %s124
      %s142 = sphi 0, %s142
      %s144 = sphi 0, %s142
      %s145 = sphi 0, %s144
      %s159 = sphi 0, %s145
      %s163 = sphi 0, %s163
      %s165 = sphi 0, %s163
      %s166 = sphi 0, %s165
      %s180 = sphi 0, %s166
      %s188 = sphi 0, %s190
      %s191 = sphi 0, %s188
      %s192 = sphi 0, %s191
      %s208 = sphi 0, %s192
    $region4: #{tpu_custom_call.1} parent=1 // loop_header_branch
      %27 = sbr.rel (%p25) target = $region8
    $region5: #{tpu_custom_call.1} parent=1 // loop_body
      %s29 = ssub.s32 %s24, 1
      %s30 = ssub.s32 %s24, 2
      %s37 = sadd.s32 1, %s32
      %p38 = scmp.ge.s32.totalorder %s37, 1
      %s39 = scalar_select %p38, 0, %s37
      %s40 = sadd.s32 1, %s31
      %s41 = scalar_select %p38, %s40, %s31
      %p42 = scmp.ge.s32.totalorder %s41, 2
      %s43 = scalar_select %p42, 0, %s41
      %s44 = ssub.s32 %s31, %s43
      %s45 = ssub.s32 %s32, %s39
      %s46 = sor.u32 %s44, %s45
      %p47 = scmp.eq.s32.totalorder %s46, 0
      %s49 = sadd.s32 %s48, 1
      %s50 = scalar_select %p47, %s48, %s49
      %p53 = pneg %p47
      %p54 = scmp.eq.s32.totalorder %s24, 1
      %p55 = por %p53, %p54
      %p56 = scmp.ne.s32.totalorder %s48, %s51
      %p57 = scmp.eq.s32.totalorder %s24, 0
      %p58 = por %p56, %p57
      %p59 = scmp.ne.s32.totalorder %s48, %s51
      %p60 = scmp.eq.s32.totalorder %s29, 1
      %p61 = por %p59, %p60
      %p62 = scmp.ne.s32.totalorder %s51, %s52
      %p63 = scmp.eq.s32.totalorder %s29, 0
      %p64 = por %p62, %p63
      %p65 = scmp.ne.s32.totalorder %s51, %s52
      %p66 = scmp.eq.s32.totalorder %s30, 1
      %p67 = por %p65, %p66
      %p69 = scmp.ne.s32.totalorder %s52, %s68
      %p70 = scmp.eq.s32.totalorder %s30, 0
      %p71 = por %p69, %p70
      %s72 = ssub.s32 %s31, %s43
      %s73 = ssub.s32 %s32, %s39
      %s74 = sor.u32 %s72, %s73
      %p75 = scmp.eq.s32.totalorder %s74, 0
      %s77 = sadd.s32 %s76, 1
      %s78 = scalar_select %p75, %s76, %s77
      %p81 = pneg %p75
      %p82 = scmp.eq.s32.totalorder %s24, 1
      %p83 = por %p81, %p82
      %p84 = scmp.ne.s32.totalorder %s76, %s79
      %p85 = scmp.eq.s32.totalorder %s24, 0
      %p86 = por %p84, %p85
      %p87 = scmp.ne.s32.totalorder %s76, %s79
      %p88 = scmp.eq.s32.totalorder %s29, 1
      %p89 = por %p87, %p88
      %p90 = scmp.ne.s32.totalorder %s79, %s80
      %p91 = scmp.eq.s32.totalorder %s29, 0
      %p92 = por %p90, %p91
      %p93 = scmp.ne.s32.totalorder %s79, %s80
      %p94 = scmp.eq.s32.totalorder %s30, 1
      %p95 = por %p93, %p94
      %p97 = scmp.ne.s32.totalorder %s80, %s96
      %p98 = scmp.eq.s32.totalorder %s30, 0
      %p99 = por %p97, %p98
      %s101 = sadd.s32 %s100, 1
      %p104 = scmp.eq.s32.totalorder %s24, 1
      %p105 = scmp.ne.s32.totalorder %s100, %s102
      %p106 = scmp.eq.s32.totalorder %s24, 0
      %p107 = por %p105, %p106
      %p108 = scmp.ne.s32.totalorder %s100, %s102
      %p109 = scmp.eq.s32.totalorder %s29, 1
      %p110 = por %p108, %p109
      %p111 = scmp.ne.s32.totalorder %s102, %s103
      %p112 = scmp.eq.s32.totalorder %s29, 0
      %p113 = por %p111, %p112
      %p114 = scmp.ne.s32.totalorder %s102, %s103
      %p115 = scmp.eq.s32.totalorder %s30, 1
      %p116 = por %p114, %p115
      %p118 = scmp.ne.s32.totalorder %s103, %s117
      %p119 = scmp.eq.s32.totalorder %s30, 0
      %p120 = por %p118, %p119
      %s122 = sadd.s32 %s121, 1
      %p125 = scmp.eq.s32.totalorder %s24, 1
      %p126 = scmp.ne.s32.totalorder %s121, %s123
      %p127 = scmp.eq.s32.totalorder %s24, 0
      %p128 = por %p126, %p127
      %p129 = scmp.ne.s32.totalorder %s121, %s123
      %p130 = scmp.eq.s32.totalorder %s29, 1
      %p131 = por %p129, %p130
      %p132 = scmp.ne.s32.totalorder %s123, %s124
      %p133 = scmp.eq.s32.totalorder %s29, 0
      %p134 = por %p132, %p133
      %p135 = scmp.ne.s32.totalorder %s123, %s124
      %p136 = scmp.eq.s32.totalorder %s30, 1
      %p137 = por %p135, %p136
      %p139 = scmp.ne.s32.totalorder %s124, %s138
      %p140 = scmp.eq.s32.totalorder %s30, 0
      %p141 = por %p139, %p140
      %s143 = sadd.s32 %s142, 1
      %p146 = scmp.eq.s32.totalorder %s24, 1
      %p147 = scmp.ne.s32.totalorder %s142, %s144
      %p148 = scmp.eq.s32.totalorder %s24, 0
      %p149 = por %p147, %p148
      %p150 = scmp.ne.s32.totalorder %s142, %s144
      %p151 = scmp.eq.s32.totalorder %s29, 1
      %p152 = por %p150, %p151
      %p153 = scmp.ne.s32.totalorder %s144, %s145
      %p154 = scmp.eq.s32.totalorder %s29, 0
      %p155 = por %p153, %p154
      %p156 = scmp.ne.s32.totalorder %s144, %s145
      %p157 = scmp.eq.s32.totalorder %s30, 1
      %p158 = por %p156, %p157
      %p160 = scmp.ne.s32.totalorder %s145, %s159
      %p161 = scmp.eq.s32.totalorder %s30, 0
      %p162 = por %p160, %p161
      %s164 = sadd.s32 %s163, 1
      %p167 = scmp.eq.s32.totalorder %s24, 1
      %p168 = scmp.ne.s32.totalorder %s163, %s165
      %p169 = scmp.eq.s32.totalorder %s24, 0
      %p170 = por %p168, %p169
      %p171 = scmp.ne.s32.totalorder %s163, %s165
      %p172 = scmp.eq.s32.totalorder %s29, 1
      %p173 = por %p171, %p172
      %p174 = scmp.ne.s32.totalorder %s165, %s166
      %p175 = scmp.eq.s32.totalorder %s29, 0
      %p176 = por %p174, %p175
      %p177 = scmp.ne.s32.totalorder %s165, %s166
      %p178 = scmp.eq.s32.totalorder %s30, 1
      %p179 = por %p177, %p178
      %p181 = scmp.ne.s32.totalorder %s166, %s180
      %p182 = scmp.eq.s32.totalorder %s30, 0
      %p183 = por %p181, %p182
      %s184 = ssub.s32 %s31, %s43
      %s185 = ssub.s32 %s32, %s39
      %s186 = sor.u32 %s184, %s185
      %p187 = scmp.eq.s32.totalorder %s186, 0
      %s189 = sadd.s32 %s188, 1
      %s190 = scalar_select %p187, %s188, %s189
      %p193 = pneg %p187
      %p194 = scmp.eq.s32.totalorder %s24, 1
      %p195 = por %p193, %p194
      %p196 = scmp.ne.s32.totalorder %s188, %s191
      %p197 = scmp.eq.s32.totalorder %s24, 0
      %p198 = por %p196, %p197
      %p199 = scmp.ne.s32.totalorder %s188, %s191
      %p200 = scmp.eq.s32.totalorder %s29, 1
      %p201 = por %p199, %p200
      %p202 = scmp.ne.s32.totalorder %s191, %s192
      %p203 = scmp.eq.s32.totalorder %s29, 0
      %p204 = por %p202, %p203
      %p205 = scmp.ne.s32.totalorder %s191, %s192
      %p206 = scmp.eq.s32.totalorder %s30, 1
      %p207 = por %p205, %p206
      %p209 = scmp.ne.s32.totalorder %s192, %s208
      %p210 = scmp.eq.s32.totalorder %s30, 0
      %p211 = por %p209, %p210
      %p212 = scmp.le.s32.totalorder 1, %s24
      %p213 = scmp.lt.s32.totalorder %s24, 3
      %p214 = pnand %p212, %p213
      %p215 = pneg %p214
      // Predicated region
      $region9: #{tpu_custom_call.1} parent=5 // pred_check
        _
      $region10: #{tpu_custom_call.1} parent=5 // pred_check_branch
        %217 = sbr.rel (%p214) target = $region12
      $region11: #{tpu_custom_call.1} parent=5 // pred_region
        %s218 = ssub.s32 %s24, 1
        // Predicated region
        $region13: #{tpu_custom_call.1} parent=11 // pred_check
          %p219 = pneg %p113
        $region14: #{tpu_custom_call.1} parent=11 // pred_check_branch
          %221 = sbr.rel (%p219) target = $region16
        $region15: #{tpu_custom_call.1} parent=11 // pred_region
          %s223 = ssub.s32 32, 32
          %224 = vsyncadd [#allocation6], %s223
          %s226 = sshll.u32 %s2, 4
          %s227 = int_to_ptr.vmem [resolvable:$true] %s226
          %229 = dma.vmem_to_smem %s227, 32, [#allocation9], [#allocation6]
        $region16: #{tpu_custom_call.1} parent=11 // pred_fallthru
          _
        // Predicated region
        $region17: #{tpu_custom_call.1} parent=11 // pred_check
          %p230 = pneg %p134
        $region18: #{tpu_custom_call.1} parent=11 // pred_check_branch
          %232 = sbr.rel (%p230) target = $region20
        $region19: #{tpu_custom_call.1} parent=11 // pred_region
          %s234 = ssub.s32 16, 16
          %235 = vsyncadd [#allocation11], %s234
          %s237 = sshll.u32 %s3, 4
          %s238 = int_to_ptr.vmem [resolvable:$true] %s237
          %240 = dma.vmem_to_smem %s238, 16, [#allocation10], [#allocation11]
        $region20: #{tpu_custom_call.1} parent=11 // pred_fallthru
          _
        // Predicated region
        $region21: #{tpu_custom_call.1} parent=11 // pred_check
          %p241 = pneg %p155
        $region22: #{tpu_custom_call.1} parent=11 // pred_check_branch
          %243 = sbr.rel (%p241) target = $region24
        $region23: #{tpu_custom_call.1} parent=11 // pred_region
          %s245 = ssub.s32 16, 16
          %246 = vsyncadd [#allocation11], %s245
          %s248 = sshll.u32 %s4, 4
          %s249 = int_to_ptr.vmem [resolvable:$true] %s248
          %251 = dma.vmem_to_smem %s249, 16, [#allocation12], [#allocation11]
        $region24: #{tpu_custom_call.1} parent=11 // pred_fallthru
          _
        // Predicated region
        $region25: #{tpu_custom_call.1} parent=11 // pred_check
          %p252 = pneg %p176
        $region26: #{tpu_custom_call.1} parent=11 // pred_check_branch
          %254 = sbr.rel (%p252) target = $region28
        $region27: #{tpu_custom_call.1} parent=11 // pred_region
          _
        $region28: #{tpu_custom_call.1} parent=11 // pred_fallthru
          _
      $region12: #{tpu_custom_call.1} parent=5 // pred_fallthru
        _
      %p255 = scmp.lt.s32.totalorder %s24, 2
      // Predicated region
      $region29: #{tpu_custom_call.1} parent=5 // pred_check
        %p256 = pneg %p255
      $region30: #{tpu_custom_call.1} parent=5 // pred_check_branch
        %258 = sbr.rel (%p256) target = $region32
      $region31: #{tpu_custom_call.1} parent=5 // pred_region
        // Predicated region
        $region33: #{tpu_custom_call.1} parent=31 // pred_check
          %p259 = pneg %p58
        $region34: #{tpu_custom_call.1} parent=31 // pred_check_branch
          %261 = sbr.rel (%p259) target = $region36
        $region35: #{tpu_custom_call.1} parent=31 // pred_region
          %s262 = sand.u32 %s48, 1
          %s263 = scalar_lea.sflag [#allocation4], %s262
          %s264 = sand.u32 %s48, 1
          %s265 = smul.addr %s264, 16
          %s266 = scalar_lea.vmem [#allocation3], %s265
          %s268 = ssub.s32 256, 256
          %269 = vsyncadd %s263, %s268
          %s270 = smul.addr %s31, 4
          %s271 = sadd.s32 %s32, %s270
          %s272 = smul.addr %s271, 64
          %s273 = scalar_lea.hbm %s0, %s272
          %s274 = sshll.u32 %s266, 4
          %s275 = int_to_ptr.vmem [resolvable:$true] %s274
          %280 = dma.hbm_to_vmem [thread:$0]  %s273, 256, %s275, %s263, 64, 64, 4
        $region36: #{tpu_custom_call.1} parent=31 // pred_fallthru
          _
        // Predicated region
        $region37: #{tpu_custom_call.1} parent=31 // pred_check
          %p281 = pneg %p86
        $region38: #{tpu_custom_call.1} parent=31 // pred_check_branch
          %283 = sbr.rel (%p281) target = $region40
        $region39: #{tpu_custom_call.1} parent=31 // pred_region
          %s284 = sand.u32 %s76, 1
          %s285 = scalar_lea.sflag [#allocation8], %s284
          %s286 = sand.u32 %s76, 1
          %s287 = smul.addr %s286, 16
          %s288 = scalar_lea.vmem [#allocation7], %s287
          %s290 = ssub.s32 256, 256
          %291 = vsyncadd %s285, %s290
          %s292 = smul.addr %s31, 4
          %s293 = sadd.s32 %s32, %s292
          %s294 = smul.addr %s293, 64
          %s295 = scalar_lea.hbm %s1, %s294
          %s296 = sshll.u32 %s288, 4
          %s297 = int_to_ptr.vmem [resolvable:$true] %s296
          %302 = dma.hbm_to_vmem [thread:$0]  %s295, 256, %s297, %s285, 64, 64, 4
        $region40: #{tpu_custom_call.1} parent=31 // pred_fallthru
          _
      $region32: #{tpu_custom_call.1} parent=5 // pred_fallthru
        _
      %p303 = scmp.le.s32.totalorder 1, %s24
      %p304 = scmp.lt.s32.totalorder %s24, 3
      %p305 = pnand %p303, %p304
      %p306 = pneg %p305
      // Predicated region
      $region41: #{tpu_custom_call.1} parent=5 // pred_check
        _
      $region42: #{tpu_custom_call.1} parent=5 // pred_check_branch
        %308 = sbr.rel (%p305) target = $region44
      $region43: #{tpu_custom_call.1} parent=5 // pred_region
        %s309 = ssub.s32 %s24, 1
        %s310 = sand.u32 %s51, 1
        %s311 = scalar_lea.sflag [#allocation4], %s310
        %s312 = sand.u32 %s51, 1
        %s313 = smul.addr %s312, 16
        %s314 = scalar_lea.vmem [#allocation3], %s313
        // Predicated region
        $region45: #{tpu_custom_call.1} parent=43 // pred_check
          %p315 = pneg %p64
        $region46: #{tpu_custom_call.1} parent=43 // pred_check_branch
          %317 = sbr.rel (%p315) target = $region48
        $region47: #{tpu_custom_call.1} parent=43 // pred_region
          %318 = dma.done %s311, 256
        $region48: #{tpu_custom_call.1} parent=43 // pred_fallthru
          _
        %s319 = sand.u32 %s79, 1
        %s320 = scalar_lea.sflag [#allocation8], %s319
        %s321 = sand.u32 %s79, 1
        %s322 = smul.addr %s321, 16
        %s323 = scalar_lea.vmem [#allocation7], %s322
        // Predicated region
        $region49: #{tpu_custom_call.1} parent=43 // pred_check
          %p324 = pneg %p92
        $region50: #{tpu_custom_call.1} parent=43 // pred_check_branch
          %326 = sbr.rel (%p324) target = $region52
        $region51: #{tpu_custom_call.1} parent=43 // pred_region
          %327 = dma.done %s320, 256
        $region52: #{tpu_custom_call.1} parent=43 // pred_fallthru
          _
        // Predicated region
        $region53: #{tpu_custom_call.1} parent=43 // pred_check
          %p328 = pneg %p113
        $region54: #{tpu_custom_call.1} parent=43 // pred_check_branch
          %330 = sbr.rel (%p328) target = $region56
        $region55: #{tpu_custom_call.1} parent=43 // pred_region
          %331 = dma.done [#allocation6], 32
        $region56: #{tpu_custom_call.1} parent=43 // pred_fallthru
          _
        // Predicated region
        $region57: #{tpu_custom_call.1} parent=43 // pred_check
          %p332 = pneg %p134
        $region58: #{tpu_custom_call.1} parent=43 // pred_check_branch
          %334 = sbr.rel (%p332) target = $region60
        $region59: #{tpu_custom_call.1} parent=43 // pred_region
          %335 = dma.done [#allocation11], 16
        $region60: #{tpu_custom_call.1} parent=43 // pred_fallthru
          _
        // Predicated region
        $region61: #{tpu_custom_call.1} parent=43 // pred_check
          %p336 = pneg %p155
        $region62: #{tpu_custom_call.1} parent=43 // pred_check_branch
          %338 = sbr.rel (%p336) target = $region64
        $region63: #{tpu_custom_call.1} parent=43 // pred_region
          %339 = dma.done [#allocation11], 16
        $region64: #{tpu_custom_call.1} parent=43 // pred_fallthru
          _
        %340 = sfence
        %s341 = sand.u32 %s51, 1
        %s342 = scalar_lea.sflag [#allocation4], %s341
        %s343 = sand.u32 %s51, 1
        %s344 = smul.addr %s343, 16
        %s345 = scalar_lea.vmem [#allocation3], %s344
        %p346 = pneg %p64
        %p347 = pneg %p61
        %s348 = sand.u32 %s79, 1
        %s349 = scalar_lea.sflag [#allocation8], %s348
        %s350 = sand.u32 %s79, 1
        %s351 = smul.addr %s350, 16
        %s352 = scalar_lea.vmem [#allocation7], %s351
        %p353 = pneg %p92
        %p354 = pneg %p89
        %p355 = pneg %p113
        %p356 = pneg %p110
        %p357 = pneg %p134
        %p358 = pneg %p131
        %p359 = pneg %p155
        %p360 = pneg %p152
        %p361 = pneg %p176
        %p362 = pneg %p173
        %p363 = pneg %p204
        %p364 = pneg %p201
        %s365 = sand.u32 %s191, 1
        %s366 = scalar_lea.sflag [#allocation5], %s365
        %s367 = sand.u32 %s191, 1
        %s368 = smul.addr %s367, 12
        %s369 = scalar_lea.vmem [#allocation13], %s368
        %s370 = sld [smem:[#allocation10]]
        %v371 = vstv %s370
        %s372 = sld [smem:[#allocation10 + $0x1]]
        %v373 = vstv %s372
        %v374 = vld [vmem:[%s314] sm:$0xf]
        %s375 = sld [smem:[#allocation9]]
        %v376 = vstv %s375
        %v377 = vmul.f32 %v374, %v376
        %v378 = vadd.f32 %v371, %v377
        %s379 = sld [smem:[#allocation9 + $0x80]]
        %v380 = vstv %s379
        %v381 = vmul.f32 %v374, %v380
        %v382 = vadd.f32 %v373, %v381
        %s383 = sadd.s32 0, 4
        %s384 = scalar_lea.vmem %s314, %s383 [#allocation3]
        %v385 = vld [vmem:[%s384] sm:$0xf]
        %s386 = sld [smem:[#allocation9 + $0x1]]
        %v387 = vstv %s386
        %v388 = vmul.f32 %v385, %v387
        %v389 = vadd.f32 %v378, %v388
        %s390 = sld [smem:[#allocation9 + $0x81]]
        %v391 = vstv %s390
        %v392 = vmul.f32 %v385, %v391
        %v393 = vadd.f32 %v382, %v392
        %s394 = sadd.s32 0, 8
        %s395 = scalar_lea.vmem %s314, %s394 [#allocation3]
        %v396 = vld [vmem:[%s395] sm:$0xf]
        %s397 = sld [smem:[#allocation9 + $0x2]]
        %v398 = vstv %s397
        %v399 = vmul.f32 %v396, %v398
        %v400 = vadd.f32 %v389, %v399
        %s401 = sld [smem:[#allocation9 + $0x82]]
        %v402 = vstv %s401
        %v403 = vmul.f32 %v396, %v402
        %v404 = vadd.f32 %v393, %v403
        %s405 = sadd.s32 0, 12
        %s406 = scalar_lea.vmem %s314, %s405 [#allocation3]
        %v407 = vld [vmem:[%s406] sm:$0xf]
        %s408 = sld [smem:[#allocation9 + $0x3]]
        %v409 = vstv %s408
        %v410 = vmul.f32 %v407, %v409
        %v411 = vadd.f32 %v400, %v410
        %s412 = sld [smem:[#allocation9 + $0x83]]
        %v413 = vstv %s412
        %v414 = vmul.f32 %v407, %v413
        %v415 = vadd.f32 %v404, %v414
        %416 = vst [vmem:[%s369] sm:$0xf] %v411
        %s417 = scalar_lea.vmem %s369, %s383 [#allocation13]
        %418 = vst [vmem:[%s417] sm:$0xf] %v415
        %s419 = sld [smem:[#allocation2]]
        %v420 = vstv %s419
        %v421 = vld [vmem:[%s323] sm:$0xf]
        %s422 = sld [smem:[#allocation12]]
        %v423 = vstv %s422
        %v424 = vmul.f32 %v421, %v423
        %v425 = vadd.f32 %v420, %v424
        %s426 = scalar_lea.vmem %s323, %s383 [#allocation7]
        %v427 = vld [vmem:[%s426] sm:$0xf]
        %s428 = sld [smem:[#allocation12 + $0x1]]
        %v429 = vstv %s428
        %v430 = vmul.f32 %v427, %v429
        %v431 = vadd.f32 %v425, %v430
        %s432 = scalar_lea.vmem %s323, %s394 [#allocation7]
        %v433 = vld [vmem:[%s432] sm:$0xf]
        %s434 = sld [smem:[#allocation12 + $0x2]]
        %v435 = vstv %s434
        %v436 = vmul.f32 %v433, %v435
        %v437 = vadd.f32 %v431, %v436
        %s438 = scalar_lea.vmem %s323, %s405 [#allocation7]
        %v439 = vld [vmem:[%s438] sm:$0xf]
        %s440 = sld [smem:[#allocation12 + $0x3]]
        %v441 = vstv %s440
        %v442 = vmul.f32 %v439, %v441
        %v443 = vadd.f32 %v437, %v442
        %s444 = scalar_lea.vmem %s369, %s394 [#allocation13]
        %445 = vst [vmem:[%s444] sm:$0xf] %v443
        %s446 = sand.u32 %s191, 1
        %s447 = scalar_lea.sflag [#allocation5], %s446
        %s448 = sand.u32 %s191, 1
        %s449 = smul.addr %s448, 12
        %s450 = scalar_lea.vmem [#allocation13], %s449
        // Predicated region
        $region65: #{tpu_custom_call.1} parent=43 // pred_check
          %p451 = pneg %p201
        $region66: #{tpu_custom_call.1} parent=43 // pred_check_branch
          %453 = sbr.rel (%p451) target = $region68
        $region67: #{tpu_custom_call.1} parent=43 // pred_region
          %s455 = ssub.s32 192, 192
          %456 = vsyncadd %s447, %s455
          %s457 = smul.addr %s33, 3
          %s458 = sadd.s32 %s34, %s457
          %s459 = smul.addr %s458, 64
          %s460 = scalar_lea.hbm %s6, %s459
          %s461 = sshll.u32 %s450, 4
          %s462 = int_to_ptr.vmem [resolvable:$true] %s461
          %467 = dma.vmem_to_hbm [thread:$0]  %s462, 192, %s460, %s447, 64, 64, 4
        $region68: #{tpu_custom_call.1} parent=43 // pred_fallthru
          _
      $region44: #{tpu_custom_call.1} parent=5 // pred_fallthru
        _
      %p468 = scmp.le.s32.totalorder 2, %s24
      // Predicated region
      $region69: #{tpu_custom_call.1} parent=5 // pred_check
        %p469 = pneg %p468
      $region70: #{tpu_custom_call.1} parent=5 // pred_check_branch
        %471 = sbr.rel (%p469) target = $region72
      $region71: #{tpu_custom_call.1} parent=5 // pred_region
        %s472 = ssub.s32 %s24, 2
        // Predicated region
        $region73: #{tpu_custom_call.1} parent=71 // pred_check
          %p473 = pneg %p207
        $region74: #{tpu_custom_call.1} parent=71 // pred_check_branch
          %475 = sbr.rel (%p473) target = $region76
        $region75: #{tpu_custom_call.1} parent=71 // pred_region
          %s476 = sand.u32 %s192, 1
          %s477 = scalar_lea.sflag [#allocation5], %s476
          %s478 = sand.u32 %s192, 1
          %s479 = smul.addr %s478, 12
          %s480 = scalar_lea.vmem [#allocation13], %s479
          %481 = dma.done %s477, 192
        $region76: #{tpu_custom_call.1} parent=71 // pred_fallthru
          _
      $region72: #{tpu_custom_call.1} parent=5 // pred_fallthru
        _
    $region6: #{tpu_custom_call.1} parent=1 // loop_footer
      %s28 = sadd.s32 1, %s24
    $region7: #{tpu_custom_call.1} parent=1 // loop_footer_branch
      %23 = sbr.rel target = $region3
    $region8: #{tpu_custom_call.1} parent=1 // loop_exit
      _
    %482 = vsyncpa [#allocation4], 1
    %s483 = scalar_lea.sflag [#allocation4], 1
    %484 = vsyncpa %s483, 1
    %485 = vsyncpa [#allocation8], 1
    %s486 = scalar_lea.sflag [#allocation8], 1
    %487 = vsyncpa %s486, 1
    %488 = vsyncpa [#allocation5], 1
    %s489 = scalar_lea.sflag [#allocation5], 1
    %490 = vsyncpa %s489, 1
    %491 = vsyncpa [#allocation6], 1
    %s492 = scalar_lea.sflag [#allocation6], 1
    %493 = vsyncpa %s492, 1
    %494 = vsyncpa [#allocation11], 1

</llo_original>
